<compile_context>
chip_gen: v7x
topology: tpu7x:2x2x1
jax: 0.10.0
libtpu: 0.0.40
codegen_flags: <defaults>
</compile_context>

<pallas_src>
import jax
import jax.numpy as jnp
from jax.experimental import pallas as pl
from jax.experimental.pallas import tpu as pltpu


def _make_pad_kernel(pad_left, pad_top, H, W):
    def pad_kernel(x_ref, o_ref):
        # Single full-width unmasked zero store per vreg (cheap on the single
        # vst slot, no per-region mask/iota work), then paste the interior.
        # TODO(synk): for very wide W the interior paste could instead be a
        # strided HBM->HBM DMA (memory_space=pl.ANY + make_async_copy) to skip
        # the pad_left lane-rotate on the vld/vst path entirely.
        # TODO(synk): for bf16/int8 inputs with pad_top not a multiple of the
        # sublane packing factor, the interior store may repack row pairs.
        o_ref[...] = jnp.zeros_like(o_ref)
        o_ref[:, pad_top:pad_top + H, pad_left:pad_left + W] = x_ref[...]

    return pad_kernel


def _largest_divisor_leq(n, cap):
    cap = int(max(1, min(cap, n)))
    for d in range(cap, 0, -1):
        if n % d == 0:
            return d
    return 1


def pad2d(x, pad_info=(2, 3, 2, 3), *, use_xla_fastpath=True):
    """F.pad(x, (left, right, top, bottom), 'constant', 0) for NCHW input."""
    pad_left, pad_right, pad_top, pad_bottom = (int(p) for p in pad_info)
    # TODO(synk): negative pads (cropping) are valid in F.pad but not handled.
    assert min(pad_left, pad_right, pad_top, pad_bottom) >= 0, \
        "negative (cropping) pads not supported"

    N, C, H, W = x.shape
    H_out = H + pad_top + pad_bottom
    W_out = W + pad_left + pad_right

    def _xla_pad():
        return jnp.pad(
            x,
            ((0, 0), (0, 0), (pad_top, pad_bottom), (pad_left, pad_right)),
            mode="constant",
            constant_values=0,
        )

    # Lane-sparse output: with W_out < 128 every output store is a masked
    # partial vst and the paste needs a lane rotate -- the kernel cannot reach
    # HBM roofline for such shapes on any TPU generation. Let XLA pad handle it.
    if use_xla_fastpath and W_out < 128:
        return _xla_pad()

    NC = N * C
    itemsize = jnp.dtype(x.dtype).itemsize
    plane_bytes = (H * W + H_out * W_out) * itemsize

    # Very large planes: one double-buffered (in+out) plane would not fit the
    # scoped VMEM limits (16/32 MiB defaults, 64 MiB physical on v7x).
    # TODO(synk): split H into a second grid axis instead of falling back.
    if plane_bytes > (12 << 20):
        return _xla_pad()

    # --- Block-size selection ------------------------------------------------
    vmem_budget = 4 << 20                       # in+out bytes per grid step
    b_fit = max(1, vmem_budget // plane_bytes)
    b_cap = min(b_fit, pl.cdiv(NC, 4))          # >= 4 steps (>= 2 for megacore)
    B = _largest_divisor_leq(NC, b_cap)         # exact divisor: no partial block
    grid = NC // B

    # Double-buffered in+out blocks plus headroom for Mosaic internal scratch.
    vmem_limit = int(2 * B * plane_bytes + (4 << 20))

    x_flat = x.reshape(NC, H, W)
    kernel = _make_pad_kernel(pad_left, pad_top, H, W)

    # Pure data movement: advise XLA's scheduler accordingly.
    cost = pl.CostEstimate(
        flops=0,
        transcendentals=0,
        bytes_accessed=NC * plane_bytes,
    )

    out_flat = pl.pallas_call(
        kernel,
        out_shape=jax.ShapeDtypeStruct((NC, H_out, W_out), x.dtype),
        grid_spec=pltpu.PrefetchScalarGridSpec(
            num_scalar_prefetch=0,
            grid=(grid,),
            # Last two block dims equal the full array dims, so the (8, 128)
            # tiling constraint is satisfied regardless of H/W values.
            in_specs=[pl.BlockSpec((B, H, W), lambda i: (i, 0, 0))],
            out_specs=pl.BlockSpec((B, H_out, W_out), lambda i: (i, 0, 0)),
        ),
        compiler_params=pltpu.CompilerParams(
            dimension_semantics=("parallel",),
            vmem_limit_bytes=vmem_limit,
        ),
        cost_estimate=cost,
    )(x_flat)

    return out_flat.reshape(N, C, H_out, W_out)


if __name__ == "__main__":
    key = jax.random.PRNGKey(0)
    pad_info = (2, 3, 2, 3)  # (left, right, top, bottom), module default
    p_l, p_r, p_t, p_b = pad_info

    # 1) Module-default small shape (W_out = 21 < 128): XLA fast path.
    x1 = jax.random.normal(key, (2, 4, 16, 16), dtype=jnp.float32)
    out1 = jax.block_until_ready(pad2d(x1, pad_info))
    ref1 = jnp.pad(x1, ((0, 0), (0, 0), (p_t, p_b), (p_l, p_r)),
                   mode="constant", constant_values=0.0)
    assert out1.shape == (2, 4, 21, 21), out1.shape
    assert out1.dtype == x1.dtype
    assert jnp.allclose(out1, ref1), "fast-path mismatch vs jnp.pad"

    # 2) Same shape with the Pallas kernel forced (correctness even when the
    #    output is lane-sparse; also exercises the divisor B / multi-step grid).
    out2 = jax.block_until_ready(pad2d(x1, pad_info, use_xla_fastpath=False))
    assert out2.shape == ref1.shape
    assert jnp.allclose(out2, ref1), "forced-Pallas mismatch vs jnp.pad"

    # 3) Lane-dense shape (W_out = 133 >= 128) hitting the tuned Pallas path:
    #    NC = 8 -> B = 2, grid = 4 pipelined steps.
    x3 = jax.random.normal(key, (2, 4, 16, 128), dtype=jnp.float32)
    out3 = jax.block_until_ready(pad2d(x3, pad_info))
    ref3 = jnp.pad(x3, ((0, 0), (0, 0), (p_t, p_b), (p_l, p_r)),
                   mode="constant", constant_values=0.0)
    assert out3.shape == (2, 4, 21, 133), out3.shape
    assert out3.dtype == x3.dtype
    assert jnp.allclose(out3, ref3), "Pallas-path mismatch vs jnp.pad"

    print("KERNEL_OK")
</pallas_src>

<mosaic_0001>
module attributes {stable_mosaic.version = 11 : i64} {
  func.func @pad_kernel(%arg0: i32, %arg1: memref<2x16x16xf32, #tpu.memory_space<vmem>>, %arg2: memref<2x21x21xf32, #tpu.memory_space<vmem>>) attributes {dimension_semantics = [#tpu.dimension_semantics<parallel>], iteration_bounds = array<i64: 4>, scalar_prefetch = 0 : i64, scratch_operands = 0 : i64, tpu.core_type = #tpu.core_type<tc>, window_params = [{transform_indices = @transform_0, window_bounds = array<i64: 2, 16, 16>}, {transform_indices = @transform_1, window_bounds = array<i64: 2, 21, 21>}]} {
    %cst = arith.constant 0.000000e+00 : f32
    %0 = vector.broadcast %cst : f32 to vector<2x21x21xf32>
    %c0 = arith.constant 0 : index
    %c0_0 = arith.constant 0 : index
    %c0_1 = arith.constant 0 : index
    %1 = vector.load %arg2[%c0, %c0_0, %c0_1] : memref<2x21x21xf32, #tpu.memory_space<vmem>>, vector<2x21x21xf32>
    tpu.vector_store %arg2[%c0, %c0_0, %c0_1], %0 {strides = array<i32>} : memref<2x21x21xf32, #tpu.memory_space<vmem>>, vector<2x21x21xf32>,
    %c0_2 = arith.constant 0 : index
    %c0_3 = arith.constant 0 : index
    %c0_4 = arith.constant 0 : index
    %2 = vector.load %arg1[%c0_2, %c0_3, %c0_4] : memref<2x16x16xf32, #tpu.memory_space<vmem>>, vector<2x16x16xf32>
    %c0_5 = arith.constant 0 : index
    %c2 = arith.constant 2 : index
    %c2_6 = arith.constant 2 : index
    %3 = vector.load %arg2[%c0_5, %c2, %c2_6] : memref<2x21x21xf32, #tpu.memory_space<vmem>>, vector<2x16x16xf32>
    tpu.vector_store %arg2[%c0_5, %c2, %c2_6], %2 {strides = array<i32>} : memref<2x21x21xf32, #tpu.memory_space<vmem>>, vector<2x16x16xf32>,
    return
  }
  func.func @transform_0(%arg0: i32) -> (i32, i32, i32) {
    %c0_i32 = arith.constant 0 : i32
    %c0_i32_0 = arith.constant 0 : i32
    %c0_i32_1 = arith.constant 0 : i32
    return %arg0, %c0_i32, %c0_i32_0 : i32, i32, i32
  }
  func.func @transform_1(%arg0: i32) -> (i32, i32, i32) {
    %c0_i32 = arith.constant 0 : i32
    %c0_i32_0 = arith.constant 0 : i32
    %c0_i32_1 = arith.constant 0 : i32
    return %arg0, %c0_i32, %c0_i32_0 : i32, i32, i32
  }
}

</mosaic_0001>

<llo_original>
// kernel: tpu_custom_call.1
$region0: #{tpu_custom_call.1}
  #allocation0 [shape = 'u32[]', space=smem, size = 0x4, offset = 0x4, fixed_abs, tag = 'smem constant byte address 0x4 - core index']
  #allocation1 [shape = 'u32[144,128]{1,0:T(1,128)}', space=vmem, size = 0x12000, scoped, tag = 'internal scratch']
  %s0 = inlined_call_operand.hbm [shape: f32[8,16,16], index: 0, kind: input, shape index: {}]
  %s1 = inlined_call_operand.vmem [shape: f32[8,21,21], index: 1, kind: output, shape index: {}]
  %s2 = sld [smem:[#allocation0]]
  $region41: #{tpu_custom_call.1} parent=0
    _
  %s4 = ssub.s32 1, %s2
  %s5 = scalar_select 0, %s4, %s2
  $region1: #{tpu_custom_call.1} parent=0
    #allocation2 [shape = 'u8[32768]{0}', space=vmem, size = 0x8000, scoped, tag = 'input window, operand 0']
    #allocation3 [shape = 's32[2]{0}', space=sflag, size = 0x8, scoped, tag = 'scoped memory for tpu_custom_call.1']
    %6 = vsyncpa [#allocation3], 0
    %s7 = scalar_lea.sflag [#allocation3], 1
    %8 = vsyncpa %s7, 0
    loop: start=0, step=1, limit=6
    $region2: #{tpu_custom_call.1} parent=1 // loop_pre_header
      _
    $region3: #{tpu_custom_call.1} parent=1 // loop_header
      %s10 = sphi 0, %s14
      %p11 = scmp.ge.s32.totalorder %s10, 6
      %s20 = sphi 0, %s22
      %s23 = sphi 0, %s20
      %s24 = sphi 0, %s23
      %s40 = sphi 0, %s24
      %s46 = sphi 0, %s48
      %s49 = sphi 0, %s46
      %s50 = sphi 0, %s49
      %s66 = sphi 0, %s50
    $region4: #{tpu_custom_call.1} parent=1 // loop_header_branch
      %13 = sbr.rel (%p11) target = $region8
    $region5: #{tpu_custom_call.1} parent=1 // loop_body
      %s15 = ssub.s32 %s10, 1
      %s16 = ssub.s32 %s10, 2
      %s17 = sadd.s32 %s10, 1
      %s18 = ssub.s32 %s10, %s17
      %p19 = scmp.eq.s32.totalorder %s18, 0
      %s21 = sadd.s32 %s20, 1
      %s22 = scalar_select %p19, %s20, %s21
      %p25 = pneg %p19
      %p26 = scmp.eq.s32.totalorder %s10, 3
      %p27 = por %p25, %p26
      %p28 = scmp.ne.s32.totalorder %s20, %s23
      %p29 = scmp.eq.s32.totalorder %s10, 0
      %p30 = por %p28, %p29
      %p31 = scmp.ne.s32.totalorder %s20, %s23
      %p32 = scmp.eq.s32.totalorder %s15, 3
      %p33 = por %p31, %p32
      %p34 = scmp.ne.s32.totalorder %s23, %s24
      %p35 = scmp.eq.s32.totalorder %s15, 0
      %p36 = por %p34, %p35
      %p37 = scmp.ne.s32.totalorder %s23, %s24
      %p38 = scmp.eq.s32.totalorder %s16, 3
      %p39 = por %p37, %p38
      %p41 = scmp.ne.s32.totalorder %s24, %s40
      %p42 = scmp.eq.s32.totalorder %s16, 0
      %p43 = por %p41, %p42
      %s44 = ssub.s32 %s10, %s17
      %p45 = scmp.eq.s32.totalorder %s44, 0
      %s47 = sadd.s32 %s46, 1
      %s48 = scalar_select %p45, %s46, %s47
      %p51 = pneg %p45
      %p52 = scmp.eq.s32.totalorder %s10, 3
      %p53 = por %p51, %p52
      %p54 = scmp.ne.s32.totalorder %s46, %s49
      %p55 = scmp.eq.s32.totalorder %s10, 0
      %p56 = por %p54, %p55
      %p57 = scmp.ne.s32.totalorder %s46, %s49
      %p58 = scmp.eq.s32.totalorder %s15, 3
      %p59 = por %p57, %p58
      %p60 = scmp.ne.s32.totalorder %s49, %s50
      %p61 = scmp.eq.s32.totalorder %s15, 0
      %p62 = por %p60, %p61
      %p63 = scmp.ne.s32.totalorder %s49, %s50
      %p64 = scmp.eq.s32.totalorder %s16, 3
      %p65 = por %p63, %p64
      %p67 = scmp.ne.s32.totalorder %s50, %s66
      %p68 = scmp.eq.s32.totalorder %s16, 0
      %p69 = por %p67, %p68
      %p70 = scmp.le.s32.totalorder 1, %s10
      %p71 = scmp.lt.s32.totalorder %s10, 5
      %p72 = pnand %p70, %p71
      %p73 = pneg %p72
      // Predicated region
      $region9: #{tpu_custom_call.1} parent=5 // pred_check
        _
      $region10: #{tpu_custom_call.1} parent=5 // pred_check_branch
        %75 = sbr.rel (%p72) target = $region12
      $region11: #{tpu_custom_call.1} parent=5 // pred_region
        %s76 = ssub.s32 %s10, 1
      $region12: #{tpu_custom_call.1} parent=5 // pred_fallthru
        _
      %p77 = scmp.lt.s32.totalorder %s10, 4
      // Predicated region
      $region13: #{tpu_custom_call.1} parent=5 // pred_check
        %p78 = pneg %p77
      $region14: #{tpu_custom_call.1} parent=5 // pred_check_branch
        %80 = sbr.rel (%p78) target = $region16
      $region15: #{tpu_custom_call.1} parent=5 // pred_region
        // Predicated region
        $region17: #{tpu_custom_call.1} parent=15 // pred_check
          %p81 = pneg %p30
        $region18: #{tpu_custom_call.1} parent=15 // pred_check_branch
          %83 = sbr.rel (%p81) target = $region20
        $region19: #{tpu_custom_call.1} parent=15 // pred_region
          %s84 = sand.u32 %s20, 1
          %s85 = scalar_lea.sflag [#allocation3], %s84
          %s86 = sand.u32 %s20, 1
          %s87 = smul.addr %s86, 32
          %s88 = scalar_lea.vmem [#allocation2], %s87
          %s89 = smul.u32 2, %s10
          %s91 = ssub.s32 512, 512
          %92 = vsyncadd %s85, %s91
          %s93 = smul.addr %s89, 2
          %s94 = smul.addr %s93, 128
          %s95 = scalar_lea.hbm %s0, %s94
          %s96 = sshll.u32 %s88, 4
          %s97 = int_to_ptr.vmem [resolvable:$true] %s96
          %102 = dma.hbm_to_vmem [thread:$0]  %s95, 512, %s97, %s85, 128, 128, 8
        $region20: #{tpu_custom_call.1} parent=15 // pred_fallthru
          _
      $region16: #{tpu_custom_call.1} parent=5 // pred_fallthru
        _
      %p103 = scmp.le.s32.totalorder 1, %s10
      %p104 = scmp.lt.s32.totalorder %s10, 5
      %p105 = pnand %p103, %p104
      %p106 = pneg %p105
      // Predicated region
      $region21: #{tpu_custom_call.1} parent=5 // pred_check
        _
      $region22: #{tpu_custom_call.1} parent=5 // pred_check_branch
        %108 = sbr.rel (%p105) target = $region24
      $region23: #{tpu_custom_call.1} parent=5 // pred_region
        %s109 = ssub.s32 %s10, 1
        %s110 = sand.u32 %s23, 1
        %s111 = scalar_lea.sflag [#allocation3], %s110
        %s112 = sand.u32 %s23, 1
        %s113 = smul.addr %s112, 32
        %s114 = scalar_lea.vmem [#allocation2], %s113
        // Predicated region
        $region25: #{tpu_custom_call.1} parent=23 // pred_check
          %p115 = pneg %p36
        $region26: #{tpu_custom_call.1} parent=23 // pred_check_branch
          %117 = sbr.rel (%p115) target = $region28
        $region27: #{tpu_custom_call.1} parent=23 // pred_region
          %118 = dma.done %s111, 512
        $region28: #{tpu_custom_call.1} parent=23 // pred_fallthru
          _
        %s119 = sand.u32 %s23, 1
        %s120 = scalar_lea.sflag [#allocation3], %s119
        %s121 = sand.u32 %s23, 1
        %s122 = smul.addr %s121, 32
        %s123 = scalar_lea.vmem [#allocation2], %s122
        %p124 = pneg %p36
        %p125 = pneg %p33
        %p126 = pneg %p62
        %p127 = pneg %p59
        %s128 = smul.u32 2, %s15
        %p129 = scmp.lt.s32.totalorder %s128, 7
        %s130 = scalar_select %p129, %s128, 7
        %s131 = smul.addr %s130, 3
        %s132 = smul.addr %s131, 8
        %s133 = scalar_lea.vmem %s1, %s132
        %s134 = smul.u32 2, %s15
        %s135 = smul.u32 2, %s15
        %p136 = scmp.lt.s32.totalorder %s135, 7
        %s137 = scalar_select %p136, %s135, 7
        %s138 = smul.addr %s137, 3
        %s139 = smul.addr %s138, 8
        %s140 = scalar_lea.vmem %s1, %s139
        %s141 = smul.u32 2, %s15
        %vm142 = vcmask 171008
        %143 = vst.msk [vmem:[%s140] sm:$0xff] %vm142, 0.0
        %144 = vst.msk [vmem:[%s140 + $0x8] sm:$0xff] %vm142, 0.0
        %vm145 = vcmask 167936
        %146 = vst.msk [vmem:[%s140 + $0x10] sm:$0x1f] %vm145, 0.0
        %147 = vst.msk [vmem:[%s140 + $0x18] sm:$0xff] %vm142, 0.0
        %148 = vst.msk [vmem:[%s140 + $0x20] sm:$0xff] %vm142, 0.0
        %149 = vst.msk [vmem:[%s140 + $0x28] sm:$0x1f] %vm145, 0.0
        %v150 = vld [vmem:[%s114] sm:$0xff]
        %v151 = vld [vmem:[%s114 + $0x8] sm:$0xff]
        %v152 = vld [vmem:[%s114 + $0x10] sm:$0xff]
        %v153 = vld [vmem:[%s114 + $0x18] sm:$0xff]
        %158 = vrot.lane.b32.xlu0 %v150, 2
        %v159 = vpop.permute.xlu0 %158
        %160 = vrot.lane.b32.xlu0 %v151, 2
        %v161 = vpop.permute.xlu0 %160
        %162 = vrot.lane.b32.xlu0 %v152, 2
        %v163 = vpop.permute.xlu0 %162
        %164 = vrot.lane.b32.xlu0 %v153, 2
        %v165 = vpop.permute.xlu0 %164
        %vm170 = vcmask 146448
        %171 = vst.msk [vmem:[%s140 + $0x2] sm:$0xff] %vm170, %v159
        %172 = vst.msk [vmem:[%s140 + $0xa] sm:$0xff] %vm170, %v161
        %173 = vst.msk [vmem:[%s140 + $0x1a] sm:$0xff] %vm170, %v163
        %174 = vst.msk [vmem:[%s140 + $0x22] sm:$0xff] %vm170, %v165
        %s175 = smul.u32 2, %s15
        %p176 = scmp.lt.s32.totalorder %s175, 7
        %s177 = scalar_select %p176, %s175, 7
        %s178 = smul.addr %s177, 3
        %s179 = smul.addr %s178, 8
        %s180 = scalar_lea.vmem %s1, %s179
        // Predicated region
        $region29: #{tpu_custom_call.1} parent=23 // pred_check
          %p181 = pneg %p59
        $region30: #{tpu_custom_call.1} parent=23 // pred_check_branch
          %183 = sbr.rel (%p181) target = $region32
        $region31: #{tpu_custom_call.1} parent=23 // pred_region
          %s184 = smul.u32 2, %s15
        $region32: #{tpu_custom_call.1} parent=23 // pred_fallthru
          _
      $region24: #{tpu_custom_call.1} parent=5 // pred_fallthru
        _
      %p185 = scmp.le.s32.totalorder 2, %s10
      // Predicated region
      $region33: #{tpu_custom_call.1} parent=5 // pred_check
        %p186 = pneg %p185
      $region34: #{tpu_custom_call.1} parent=5 // pred_check_branch
        %188 = sbr.rel (%p186) target = $region36
      $region35: #{tpu_custom_call.1} parent=5 // pred_region
        %s189 = ssub.s32 %s10, 2
        // Predicated region
        $region37: #{tpu_custom_call.1} parent=35 // pred_check
          %p190 = pneg %p65
        $region38: #{tpu_custom_call.1} parent=35 // pred_check_branch
          %192 = sbr.rel (%p190) target = $region40
        $region39: #{tpu_custom_call.1} parent=35 // pred_region
          %s193 = smul.u32 2, %s16
          %p194 = scmp.lt.s32.totalorder %s193, 7
          %s195 = scalar_select %p194, %s193, 7
          %s196 = smul.addr %s195, 3
          %s197 = smul.addr %s196, 8
          %s198 = scalar_lea.vmem %s1, %s197
        $region40: #{tpu_custom_call.1} parent=35 // pred_fallthru
          _
      $region36: #{tpu_custom_call.1} parent=5 // pred_fallthru
        _
    $region6: #{tpu_custom_call.1} parent=1 // loop_footer
      %s14 = sadd.s32 1, %s10
    $region7: #{tpu_custom_call.1} parent=1 // loop_footer_branch
      %9 = sbr.rel target = $region3
    $region8: #{tpu_custom_call.1} parent=1 // loop_exit
      _
    %199 = vsyncpa [#allocation3], 1
    %s200 = scalar_lea.sflag [#allocation3], 1
    %201 = vsyncpa %s200, 1

</llo_original>
